<compile_context>
chip_gen: v7x
topology: tpu7x:2x2x1
jax: 0.10.0
libtpu: 0.0.40
codegen_flags: <defaults>
</compile_context>

<pallas_src>
import functools

import jax
import jax.numpy as jnp
from jax.experimental import pallas as pl
from jax.experimental.pallas import tpu as pltpu

_LANES = 128
_SUBLANES = 8


def _single_linear_kernel(x_ref, w_ref, b_ref, o_ref, *, compute_dtype):
    # x_ref: (TM, Cin)    w_ref: (Cout_p, Cin)  [native PyTorch layout]
    # b_ref: (1, Cout_p)  o_ref: (TM, Cout_p)
    x = x_ref[...].astype(compute_dtype)
    w = w_ref[...].astype(compute_dtype)
    # Contract last dim of x with last dim of w -> (TM, Cout_p); weight is
    # consumed in its native (Cout, Cin) layout, no transpose anywhere.
    y = jax.lax.dot_general(
        x, w,
        dimension_numbers=(((1,), (1,)), ((), ())),
        preferred_element_type=jnp.float32,
    )
    # f32 epilogue: bias add + LeakyReLU(negative_slope=0.01). Dropout(eval)=id.
    y = y + b_ref[...].astype(jnp.float32)
    y = jnp.maximum(y, 0.0) + 0.01 * jnp.minimum(y, 0.0)
    o_ref[...] = y.astype(o_ref.dtype)


def single_linear(x, weight, bias, *, block_m=512,
                  compute_dtype=jnp.float32, pad_out_lanes=True):
    """Linear -> Dropout(eval, identity) -> LeakyReLU(0.01).

    x: (B, Cin); weight: (Cout, Cin) (PyTorch layout, NOT transposed);
    bias: (Cout,).  Returns (B, Cout) in x.dtype.
    """
    B, Cin = x.shape
    Cout = weight.shape[0]

    # --- lane-dense output width ------------------------------------------
    Cout_p = Cout
    w_in, b_in = weight, bias
    if pad_out_lanes and (Cout % _LANES) != 0:
        Cout_p = ((Cout + _LANES - 1) // _LANES) * _LANES
        # In production, pad the parameters once at init instead of per call.
        w_in = jnp.pad(weight, ((0, Cout_p - Cout), (0, 0)))
        b_in = jnp.pad(bias, (0, Cout_p - Cout))
    b2 = b_in.reshape(1, Cout_p)  # metadata-only reshape

    # --- batch tiling (pipelined, "parallel" for megacore) -----------------
    if B <= block_m:
        tm = B                      # single tile == full array dims, no pad
    else:
        tm = block_m                # 512: multiple of 8 sublanes
    pad_b = (-B) % tm
    x_in = jnp.pad(x, ((0, pad_b), (0, 0))) if pad_b else x
    Bp = B + pad_b
    grid = (Bp // tm,)

    itemsize = x.dtype.itemsize
    cost = pl.CostEstimate(
        flops=2 * Bp * Cin * Cout_p,
        transcendentals=0,
        bytes_accessed=itemsize * (Bp * Cin + Cout_p * Cin + Cout_p + Bp * Cout_p),
    )

    kernel = functools.partial(_single_linear_kernel, compute_dtype=compute_dtype)

    out = pl.pallas_call(
        kernel,
        out_shape=jax.ShapeDtypeStruct((Bp, Cout_p), x.dtype),
        grid_spec=pltpu.PrefetchScalarGridSpec(
            num_scalar_prefetch=0,
            grid=grid,
            in_specs=[
                pl.BlockSpec((tm, Cin), lambda i: (i, 0),
                             memory_space=pltpu.MemorySpace.VMEM),
                # Constant block index -> weight/bias stay resident in VMEM
                # across the whole grid (no per-tile re-DMA).
                pl.BlockSpec((Cout_p, Cin), lambda i: (0, 0),
                             memory_space=pltpu.MemorySpace.VMEM),
                pl.BlockSpec((1, Cout_p), lambda i: (0, 0),
                             memory_space=pltpu.MemorySpace.VMEM),
            ],
            out_specs=pl.BlockSpec((tm, Cout_p), lambda i: (i, 0),
                                   memory_space=pltpu.MemorySpace.VMEM),
        ),
        compiler_params=pltpu.CompilerParams(
            dimension_semantics=("parallel",),
        ),
        cost_estimate=cost,
    )(x_in, w_in, b2)

    if pad_b or Cout_p != Cout:
        out = out[:B, :Cout]
    return out


if __name__ == "__main__":
    # Shapes implied by the forward: (batch, in_channels) -> (batch, out_channels)
    B, Cin, Cout = 8, 32, 16
    dropout_p = 0.5  # identity at inference (eval mode)

    key = jax.random.PRNGKey(0)
    kx, kw, kb = jax.random.split(key, 3)

    # Parameter init mimicking nn.Linear's U(-1/sqrt(Cin), 1/sqrt(Cin))
    bound = 1.0 / (Cin ** 0.5)
    weight = jax.random.uniform(kw, (Cout, Cin), jnp.float32, -bound, bound)
    bias = jax.random.uniform(kb, (Cout,), jnp.float32, -bound, bound)
    x = jax.random.normal(kx, (B, Cin), jnp.float32)

    # Reference (plain JAX): Linear -> Dropout(eval=identity) -> LeakyReLU(0.01)
    ref = x @ weight.T + bias
    ref = jnp.where(ref > 0, ref, 0.01 * ref)

    # f32 path.
    out = jax.block_until_ready(single_linear(x, weight, bias))
    assert out.shape == (B, Cout)
    assert jnp.allclose(out, ref, atol=1e-5, rtol=1e-5)

    # bf16 matmul operands, f32 accumulation + f32 epilogue (production path on
    # v6e/v7x); loose tolerance for bf16 mantissa.
    out_bf16 = jax.block_until_ready(
        single_linear(x, weight, bias, compute_dtype=jnp.bfloat16))
    assert jnp.allclose(out_bf16, ref, atol=1e-1, rtol=1e-1)

    # Exercise the batch-tiled path (grid > 1) to cover the pipelined branch.
    B2 = 1024 + 40  # forces padding to a multiple of tm
    x2 = jax.random.normal(kx, (B2, Cin), jnp.float32)
    ref2 = x2 @ weight.T + bias
    ref2 = jnp.where(ref2 > 0, ref2, 0.01 * ref2)
    out2 = jax.block_until_ready(single_linear(x2, weight, bias, block_m=512))
    assert out2.shape == (B2, Cout)
    assert jnp.allclose(out2, ref2, atol=1e-4, rtol=1e-4)

    print("KERNEL_OK")
</pallas_src>

<mosaic_0001>
module attributes {stable_mosaic.version = 11 : i64} {
  func.func @_single_linear_kernel(%arg0: i32, %arg1: memref<8x32xf32, #tpu.memory_space<vmem>>, %arg2: memref<128x32xf32, #tpu.memory_space<vmem>>, %arg3: memref<1x128xf32, #tpu.memory_space<vmem>>, %arg4: memref<8x128xf32, #tpu.memory_space<vmem>>) attributes {dimension_semantics = [#tpu.dimension_semantics<parallel>], iteration_bounds = array<i64: 1>, scalar_prefetch = 0 : i64, scratch_operands = 0 : i64, tpu.core_type = #tpu.core_type<tc>, window_params = [{transform_indices = @transform_0, window_bounds = array<i64: 8, 32>}, {pipeline_mode = #tpu.pipeline_mode<synchronous>, transform_indices = @transform_1, window_bounds = array<i64: 128, 32>}, {pipeline_mode = #tpu.pipeline_mode<synchronous>, transform_indices = @transform_2, window_bounds = array<i64: 1, 128>}, {transform_indices = @transform_3, window_bounds = array<i64: 8, 128>}]} {
    %c0 = arith.constant 0 : index
    %c0_0 = arith.constant 0 : index
    %0 = vector.load %arg1[%c0, %c0_0] : memref<8x32xf32, #tpu.memory_space<vmem>>, vector<8x32xf32>
    %c0_1 = arith.constant 0 : index
    %c0_2 = arith.constant 0 : index
    %1 = vector.load %arg2[%c0_1, %c0_2] : memref<128x32xf32, #tpu.memory_space<vmem>>, vector<128x32xf32>
    %cst = arith.constant dense<0.000000e+00> : vector<8x128xf32>
    %2 = tpu.matmul %0, %1, %cst {dimension_numbers = #tpu.dot_dimension_numbers<[1], [1], [0], [0], [0, 0, 1, 0], [], []>} : vector<8x32xf32>, vector<128x32xf32>, vector<8x128xf32> -> vector<8x128xf32>
    %c0_3 = arith.constant 0 : index
    %c0_4 = arith.constant 0 : index
    %3 = vector.load %arg3[%c0_3, %c0_4] : memref<1x128xf32, #tpu.memory_space<vmem>>, vector<1x128xf32>
    %4 = vector.broadcast %3 : vector<1x128xf32> to vector<8x128xf32>
    %5 = arith.addf %2, %4 : vector<8x128xf32>
    %cst_5 = arith.constant 0.000000e+00 : f32
    %6 = vector.broadcast %cst_5 : f32 to vector<8x128xf32>
    %7 = arith.maximumf %5, %6 : vector<8x128xf32>
    %cst_6 = arith.constant 0.000000e+00 : f32
    %8 = vector.broadcast %cst_6 : f32 to vector<8x128xf32>
    %9 = arith.minimumf %5, %8 : vector<8x128xf32>
    %cst_7 = arith.constant 0.00999999977 : f32
    %10 = vector.broadcast %cst_7 : f32 to vector<8x128xf32>
    %11 = arith.mulf %10, %9 : vector<8x128xf32>
    %12 = arith.addf %7, %11 : vector<8x128xf32>
    %c0_8 = arith.constant 0 : index
    %c0_9 = arith.constant 0 : index
    %13 = vector.load %arg4[%c0_8, %c0_9] : memref<8x128xf32, #tpu.memory_space<vmem>>, vector<8x128xf32>
    tpu.vector_store %arg4[%c0_8, %c0_9], %12 {strides = array<i32>} : memref<8x128xf32, #tpu.memory_space<vmem>>, vector<8x128xf32>,
    return
  }
  func.func @transform_0(%arg0: i32) -> (i32, i32) {
    %c0_i32 = arith.constant 0 : i32
    %c0_i32_0 = arith.constant 0 : i32
    return %arg0, %c0_i32 : i32, i32
  }
  func.func @transform_1(%arg0: i32) -> (i32, i32) {
    %c0_i32 = arith.constant 0 : i32
    %c0_i32_0 = arith.constant 0 : i32
    %c0_i32_1 = arith.constant 0 : i32
    return %c0_i32, %c0_i32_0 : i32, i32
  }
  func.func @transform_2(%arg0: i32) -> (i32, i32) {
    %c0_i32 = arith.constant 0 : i32
    %c0_i32_0 = arith.constant 0 : i32
    %c0_i32_1 = arith.constant 0 : i32
    return %c0_i32, %c0_i32_0 : i32, i32
  }
  func.func @transform_3(%arg0: i32) -> (i32, i32) {
    %c0_i32 = arith.constant 0 : i32
    %c0_i32_0 = arith.constant 0 : i32
    return %arg0, %c0_i32 : i32, i32
  }
}

</mosaic_0001>

<llo_original>
// kernel: tpu_custom_call.1
$region0: #{tpu_custom_call.1}
  #allocation0 [shape = 'u32[]', space=smem, size = 0x4, offset = 0x4, fixed_abs, tag = 'smem constant byte address 0x4 - core index']
  #allocation1 [shape = 'u32[144,128]{1,0:T(1,128)}', space=vmem, size = 0x12000, scoped, tag = 'internal scratch']
  %s0 = inlined_call_operand.vmem [shape: f32[8,32], index: 0, kind: input, shape index: {}]
  %s1 = inlined_call_operand.vmem [shape: f32[128,32], index: 1, kind: input, shape index: {}]
  %s2 = inlined_call_operand.vmem [shape: f32[1,128], index: 2, kind: input, shape index: {}]
  %s3 = inlined_call_operand.hbm [shape: f32[8,128], index: 3, kind: output, shape index: {}]
  %s4 = sld [smem:[#allocation0]]
  $region22: #{tpu_custom_call.1} parent=0
    _
  %s6 = ssub.s32 1, %s4
  %s7 = scalar_select 0, %s6, %s4
  $region1: #{tpu_custom_call.1} parent=0
    #allocation2 [shape = 'u8[4096]{0}', space=vmem, size = 0x1000, scoped, tag = 'output window, operand 0, single buffered']
    #allocation3 [shape = 's32[1]{0}', space=sflag, size = 0x4, scoped, tag = 'scoped memory for tpu_custom_call.1']
    %8 = vsyncpa [#allocation3], 0
    // Predicated region
    $region2: #{tpu_custom_call.1} parent=1 // pred_check
      _
    $region3: #{tpu_custom_call.1} parent=1 // pred_check_branch
      %10 = sbr.rel (0) target = $region5
    $region4: #{tpu_custom_call.1} parent=1 // pred_region
      _
    $region5: #{tpu_custom_call.1} parent=1 // pred_fallthru
      _
    // Predicated region
    $region6: #{tpu_custom_call.1} parent=1 // pred_check
      _
    $region7: #{tpu_custom_call.1} parent=1 // pred_check_branch
      %12 = sbr.rel (0) target = $region9
    $region8: #{tpu_custom_call.1} parent=1 // pred_region
      _
    $region9: #{tpu_custom_call.1} parent=1 // pred_fallthru
      _
    // Predicated region
    $region10: #{tpu_custom_call.1} parent=1 // pred_check
      _
    $region11: #{tpu_custom_call.1} parent=1 // pred_check_branch
      %14 = sbr.rel (0) target = $region13
    $region12: #{tpu_custom_call.1} parent=1 // pred_region
      _
    $region13: #{tpu_custom_call.1} parent=1 // pred_fallthru
      _
    %v15 = vld [vmem:[%s0] sm:$0xff]
    %v16 = vld [vmem:[%s1] sm:$0xff]
    %v17 = vld [vmem:[%s1 + $0x8] sm:$0xff]
    %v18 = vld [vmem:[%s1 + $0x10] sm:$0xff]
    %v19 = vld [vmem:[%s1 + $0x18] sm:$0xff]
    %v20 = vld [vmem:[%s1 + $0x20] sm:$0xff]
    %v21 = vld [vmem:[%s1 + $0x28] sm:$0xff]
    %v22 = vld [vmem:[%s1 + $0x30] sm:$0xff]
    %v23 = vld [vmem:[%s1 + $0x38] sm:$0xff]
    %v24 = vld [vmem:[%s1 + $0x40] sm:$0xff]
    %v25 = vld [vmem:[%s1 + $0x48] sm:$0xff]
    %v26 = vld [vmem:[%s1 + $0x50] sm:$0xff]
    %v27 = vld [vmem:[%s1 + $0x58] sm:$0xff]
    %v28 = vld [vmem:[%s1 + $0x60] sm:$0xff]
    %v29 = vld [vmem:[%s1 + $0x68] sm:$0xff]
    %v30 = vld [vmem:[%s1 + $0x70] sm:$0xff]
    %v31 = vld [vmem:[%s1 + $0x78] sm:$0xff]
    %v32 = vld [vmem:[%s2] sm:$0x1]
    %v34 = vlaneseq
    %v35 = vshrl.u32 %v34, 7
    %v36 = vsub.s32 0, %v35
    %v37 = vrot.slane %v32, %v36
    %vm39 = vcmask 261120
    %v41 = vsel %vm39, %v15, 0
    %v44 = vsel %vm39, %v16, 0
    %v47 = vsel %vm39, %v17, 0
    %v50 = vsel %vm39, %v18, 0
    %v53 = vsel %vm39, %v19, 0
    %v56 = vsel %vm39, %v20, 0
    %v59 = vsel %vm39, %v21, 0
    %v62 = vsel %vm39, %v22, 0
    %v65 = vsel %vm39, %v23, 0
    %v68 = vsel %vm39, %v24, 0
    %v71 = vsel %vm39, %v25, 0
    %v74 = vsel %vm39, %v26, 0
    %v77 = vsel %vm39, %v27, 0
    %v80 = vsel %vm39, %v28, 0
    %v83 = vsel %vm39, %v29, 0
    %v86 = vsel %vm39, %v30, 0
    %v89 = vsel %vm39, %v31, 0
    %91 = vmatprep.subr.mxu0 0.0
    %92 = vmatpush1.xpose.msra.mxu0 %v44
    %93 = vmatprep.subr.mxu0 0.0
    %94 = vmatpush1.xpose.msra.mxu0 %v47
    %95 = vmatprep.subr.mxu0 0.0
    %96 = vmatpush1.xpose.msra.mxu0 %v50
    %97 = vmatprep.subr.mxu0 0.0
    %98 = vmatpush1.xpose.msra.mxu0 %v53
    %99 = vmatprep.subr.mxu0 0.0
    %100 = vmatpush1.xpose.msra.mxu0 %v56
    %101 = vmatprep.subr.mxu0 0.0
    %102 = vmatpush1.xpose.msra.mxu0 %v59
    %103 = vmatprep.subr.mxu0 0.0
    %104 = vmatpush1.xpose.msra.mxu0 %v62
    %105 = vmatprep.subr.mxu0 0.0
    %106 = vmatpush1.xpose.msra.mxu0 %v65
    %107 = vmatprep.subr.mxu0 0.0
    %108 = vmatpush1.xpose.msra.mxu0 %v68
    %109 = vmatprep.subr.mxu0 0.0
    %110 = vmatpush1.xpose.msra.mxu0 %v71
    %111 = vmatprep.subr.mxu0 0.0
    %112 = vmatpush1.xpose.msra.mxu0 %v74
    %113 = vmatprep.subr.mxu0 0.0
    %114 = vmatpush1.xpose.msra.mxu0 %v77
    %115 = vmatprep.subr.mxu0 0.0
    %116 = vmatpush1.xpose.msra.mxu0 %v80
    %117 = vmatprep.subr.mxu0 0.0
    %118 = vmatpush1.xpose.msra.mxu0 %v83
    %119 = vmatprep.subr.mxu0 0.0
    %120 = vmatpush1.xpose.msra.mxu0 %v86
    %121 = vmatprep.subr.mxu0 0.0
    %122 = vmatpush1.xpose.msra.mxu0 %v89
    %123 = vmatprep.subr.mxu0 0.0
    %124 = vmatpush1.xpose.msra.mxu0 0.0
    %125 = vmatprep.subr.mxu0 0.0
    %126 = vmatpush1.xpose.msra.mxu0 0.0
    %127 = vmatprep.subr.mxu0 0.0
    %128 = vmatpush1.xpose.msra.mxu0 0.0
    %129 = vmatprep.subr.mxu0 0.0
    %130 = vmatpush1.xpose.msra.mxu0 0.0
    %131 = vmatprep.subr.mxu0 0.0
    %132 = vmatpush1.xpose.msra.mxu0 0.0
    %133 = vmatprep.subr.mxu0 0.0
    %134 = vmatpush1.xpose.msra.mxu0 0.0
    %135 = vmatprep.subr.mxu0 0.0
    %136 = vmatpush1.xpose.msra.mxu0 0.0
    %137 = vmatprep.subr.mxu0 0.0
    %138 = vmatpush1.xpose.msra.mxu0 0.0
    %139 = vmatprep.subr.mxu0 0.0
    %140 = vmatpush1.xpose.msra.mxu0 0.0
    %141 = vmatprep.subr.mxu0 0.0
    %142 = vmatpush1.xpose.msra.mxu0 0.0
    %143 = vmatprep.subr.mxu0 0.0
    %144 = vmatpush1.xpose.msra.mxu0 0.0
    %145 = vmatprep.subr.mxu0 0.0
    %146 = vmatpush1.xpose.msra.mxu0 0.0
    %147 = vmatprep.subr.mxu0 0.0
    %148 = vmatpush1.xpose.msra.mxu0 0.0
    %149 = vmatprep.subr.mxu0 0.0
    %150 = vmatpush1.xpose.msra.mxu0 0.0
    %151 = vmatprep.subr.mxu0 0.0
    %152 = vmatpush1.xpose.msra.mxu0 0.0
    %153 = vmatprep.subr.mxu0 0.0
    %154 = vmatpush1.xpose.msra.mxu0 0.0
    %155 = vmatprep.mubr.f32.mxu0 0.0
    %156 = vmatmul.mubr.f32.gmra.mrb[0].mxu0 %v41
    %v157 = vpop.f32.mrb[0].mxu0
    %v158 = vadd.f32 %v37, %v157
    %v159 = vpop.f32.mrb[0].mxu0
    %160 = vdwg.mxu0
    %v161 = vmax.f32 %v158, 0.0
    %v162 = vmin.f32 %v158, 0.0
    %v163 = vmul.f32 %v162, 0.01
    %v164 = vadd.f32 %v161, %v163
    %165 = vst [vmem:[#allocation2] sm:$0xff] %v164
    // Predicated region
    $region14: #{tpu_custom_call.1} parent=1 // pred_check
      _
    $region15: #{tpu_custom_call.1} parent=1 // pred_check_branch
      %167 = sbr.rel (0) target = $region17
    $region16: #{tpu_custom_call.1} parent=1 // pred_region
      %s169 = ssub.s32 128, 128
      %170 = vsyncadd [#allocation3], %s169
      %s172 = sshll.u32 [#allocation2], 4
      %s173 = int_to_ptr.vmem [resolvable:$true] %s172
      %175 = dma.vmem_to_hbm [thread:$0]  %s173, 128, %s3, [#allocation3]
    $region17: #{tpu_custom_call.1} parent=1 // pred_fallthru
      _
    // Predicated region
    $region18: #{tpu_custom_call.1} parent=1 // pred_check
      _
    $region19: #{tpu_custom_call.1} parent=1 // pred_check_branch
      %177 = sbr.rel (0) target = $region21
    $region20: #{tpu_custom_call.1} parent=1 // pred_region
      %178 = dma.done [#allocation3], 128
    $region21: #{tpu_custom_call.1} parent=1 // pred_fallthru
      _
    %179 = vsyncpa [#allocation3], 1

</llo_original>
